<compile_context>
chip_gen: v7x
topology: tpu7x:2x2x1
jax: 0.10.0
libtpu: 0.0.40
codegen_flags: <defaults>
</compile_context>

<pallas_src>
import functools

import jax
import jax.numpy as jnp
from jax.experimental import pallas as pl
from jax.experimental.pallas import tpu as pltpu


_LOG_EPS = 1e-07


def _round_up(x, m):
    return -(-x // m) * m


# ---------------------------------------------------------------------------
# Packed kernel: P = 128 // D logical rows per 128-lane row.
#   params_ref (SMEM, (2,) f32): [bias, weight . scale]
#   z_ref: (TMp, P*D) tile of row-packed z (native dtype)
#   w_ref: (1, P*D) f32, weight tiled P times along lanes
#   o_ref: (TMp, P) f32, element (r, q) = result for logical row r*P + q
# ---------------------------------------------------------------------------
def _planar_logdet_packed_kernel(params_ref, z_ref, w_ref, o_ref, *, d, p):
    b = params_ref[0]
    ws = params_ref[1]

    z = z_ref[...].astype(jnp.float32)          # upcast in VMEM (no HBM pass)
    prod = z * w_ref[...]                       # dense VPU multiply

    # Shared segmented lane reduce: after log2(d) folds of
    #   s[:, l] += s[:, (l + shift) mod W]
    # lane q*d holds the sum over lanes [q*d, (q+1)*d) of prod, i.e. the dot
    # product for logical row r*P + q.  The rotate is spelled as an explicit
    # two-slice concatenate (direction-unambiguous; lowers to lane rotates).
    # TODO(synk): pltpu.roll(s, W - shift, axis=1) is the single-op form.
    s = prod
    shift = d // 2
    while shift >= 1:
        s = s + jnp.concatenate([s[:, shift:], s[:, :shift]], axis=1)
        shift //= 2

    # Gather the P segment sums (lanes 0, d, 2d, ...) into a compact (TMp, P)
    # activation block; the transcendental tail then runs on it directly.
    cols = [s[:, q * d:q * d + 1] for q in range(p)]
    act = (cols[0] if p == 1 else jnp.concatenate(cols, axis=1)) + b

    t = jnp.tanh(act)
    det = 1.0 + (1.0 - t * t) * ws
    o_ref[...] = jnp.log(jnp.abs(det) + _LOG_EPS).astype(o_ref.dtype)


# ---------------------------------------------------------------------------
# Un-packed fallback kernel (any D, any N).
#   z_ref: (TM, D) tile (native dtype), w_ref: (1, D) f32, o_ref: (1, TM) f32
# ---------------------------------------------------------------------------
def _planar_logdet_kernel(params_ref, z_ref, w_ref, o_ref):
    b = params_ref[0]
    ws = params_ref[1]

    z = z_ref[...].astype(jnp.float32)                          # (TM, D)
    # TODO(synk): for D ~ 128-256 on v6e/v7x an MXU matvec would offload this
    # XLU lane reduce to the otherwise idle MXU.
    act = jnp.sum(z * w_ref[...], axis=1, keepdims=True) + b    # (TM, 1)

    # Hoist the transpose above the tanh/log tail so the EUP/VPU work runs on
    # a lane-dense (1, TM) row instead of a 1-lane column.
    act = jnp.transpose(act)                                    # (1, TM)
    t = jnp.tanh(act)
    det = 1.0 + (1.0 - t * t) * ws
    o_ref[...] = jnp.log(jnp.abs(det) + _LOG_EPS).astype(o_ref.dtype)


def _compiler_params(vmem_estimate_bytes):
    # Raise the scoped-VMEM limit only when the working set would exceed the
    # smallest default (16 MiB on v5e); keep requests modest for v7x (64 MiB
    # physical).
    limit = None
    if vmem_estimate_bytes > (12 << 20):
        limit = int(vmem_estimate_bytes) + (4 << 20)
    return pltpu.CompilerParams(dimension_semantics=("parallel",),
                                vmem_limit_bytes=limit)


def planar_flow_logdet(z, weight, bias, scale, *, target_tile_bytes=4 << 20):
    """z: (N, D), weight/scale: (1, D), bias: (1,) -> (N, 1) f32."""
    N, D = z.shape
    itemsize = jnp.dtype(z.dtype).itemsize
    sub_gran = 8 * max(1, 4 // itemsize)          # sublane tile (f32: 8, bf16: 16)

    weight_f32 = weight.astype(jnp.float32).reshape(1, D)
    scale_f32 = scale.astype(jnp.float32).reshape(1, D)
    # bias and weight.scale collapse to two SMEM scalars: constant operands
    # never touch VMEM/vld except the (1, D) weight row.
    params = jnp.stack([bias.reshape(()).astype(jnp.float32),
                        jnp.sum(weight_f32 * scale_f32)])

    # Small-D row packing: P rows per 128-lane row via a *free* reshape.
    P = 128 // D if (D < 128 and 128 % D == 0) else 1
    if P > 16 or (P > 1 and N % P != 0):
        # TODO(synk): very small D (P > 16) and ragged N fall back to the
        # un-packed kernel; correct but not fully lane-dense.
        P = 1

    if P > 1:
        W = P * D
        rows = N // P
        z_p = z.reshape(rows, W)                       # free, row-major
        w_tiled = jnp.tile(weight_f32, (1, P))         # (1, W) f32

        # Byte-budget tile sizing; keep >= 2 tiles when possible (v7x megacore).
        tm = max(sub_gran,
                 (target_tile_bytes // max(W * itemsize, 1)) // sub_gran * sub_gran)
        if tm >= rows:
            if rows >= 2 * sub_gran:
                tm = _round_up(-(-rows // 2), sub_gran)
            else:
                tm = _round_up(rows, sub_gran)
        grid = (pl.cdiv(rows, tm),)

        # VMEM working set: 2x z tile + 2x (lane-padded) out tile + weight.
        est = 2 * tm * W * itemsize + 2 * tm * 128 * 4 + W * 4 + (1 << 20)

        kernel = functools.partial(_planar_logdet_packed_kernel, d=D, p=P)
        out = pl.pallas_call(
            kernel,
            out_shape=jax.ShapeDtypeStruct((rows, P), jnp.float32),
            grid_spec=pltpu.PrefetchScalarGridSpec(
                num_scalar_prefetch=0,
                grid=grid,
                in_specs=[
                    pl.BlockSpec(memory_space=pltpu.MemorySpace.SMEM),  # [bias, w.s]
                    pl.BlockSpec((tm, W), lambda i: (i, 0)),            # packed z tile
                    pl.BlockSpec((1, W), lambda i: (0, 0)),             # tiled weight
                ],
                out_specs=pl.BlockSpec((tm, P), lambda i: (i, 0)),
            ),
            compiler_params=_compiler_params(est),
        )(params, z_p, w_tiled)
        # (rows, P) row-major == logical row order -> free reshape to (N, 1).
        return out.reshape(N, 1)

    # ---- un-packed fallback (any D, any N) --------------------------------
    d_pad = _round_up(D, 128)                      # lane-padded VMEM row width
    tm = max(128, (target_tile_bytes // max(d_pad * itemsize, 1)) // 128 * 128)
    if tm >= N:
        if N >= 256:                               # keep >= 2 tiles (v7x megacore)
            tm = _round_up(-(-N // 2), 128)
        else:
            tm = N                                 # single block == full array dims
    grid = (pl.cdiv(N, tm),)

    est = (2 * tm * d_pad * itemsize + 2 * 8 * _round_up(tm, 128) * 4
           + d_pad * 4 + (1 << 20))

    out = pl.pallas_call(
        _planar_logdet_kernel,
        out_shape=jax.ShapeDtypeStruct((1, N), jnp.float32),
        grid_spec=pltpu.PrefetchScalarGridSpec(
            num_scalar_prefetch=0,
            grid=grid,
            in_specs=[
                pl.BlockSpec(memory_space=pltpu.MemorySpace.SMEM),  # [bias, w.s]
                pl.BlockSpec((tm, D), lambda i: (i, 0)),            # z tile
                pl.BlockSpec((1, D), lambda i: (0, 0)),             # weight
            ],
            out_specs=pl.BlockSpec((1, tm), lambda i: (0, i)),      # lane-dense rows
        ),
        compiler_params=_compiler_params(est),
    )(params, z, weight_f32)
    return out.reshape(N, 1)


def planar_flow_logdet_ref(z, weight, bias, scale):
    z = z.astype(jnp.float32)
    act = z @ weight.T + bias                      # (N, 1)
    psi = (1.0 - jnp.tanh(act) ** 2) * weight      # (N, D)
    det = 1.0 + psi @ scale.T                      # (N, 1)
    return jnp.log(jnp.abs(det) + 1e-07)


if __name__ == "__main__":
    key = jax.random.PRNGKey(0)
    k_z, k_w, k_b, k_s = jax.random.split(key, 4)

    N, D = 8, 32   # batch=8, feature dim=32
    z = jax.random.normal(k_z, (N, D), dtype=jnp.float32)

    # Planar-flow parameter shapes: weight (1, D), bias (1,), scale (1, D)
    weight = 0.1 * jax.random.normal(k_w, (1, D), dtype=jnp.float32)
    bias = 0.1 * jax.random.normal(k_b, (1,), dtype=jnp.float32)
    scale = 0.1 * jax.random.normal(k_s, (1, D), dtype=jnp.float32)

    # 1) packed path (D=32 -> 4 rows per 128-lane row), single tile
    out = jax.block_until_ready(planar_flow_logdet(z, weight, bias, scale))
    ref = planar_flow_logdet_ref(z, weight, bias, scale)
    assert out.shape == (N, 1)
    assert jnp.allclose(out, ref, atol=1e-5, rtol=1e-5), "mismatch (packed)"

    # 2) packed path, multi-tile with a clipped edge block (no wrapper pad)
    N2 = 300
    z2 = jax.random.normal(k_z, (N2, D), dtype=jnp.float32)
    out2 = jax.block_until_ready(
        planar_flow_logdet(z2, weight, bias, scale, target_tile_bytes=64 * 1024))
    ref2 = planar_flow_logdet_ref(z2, weight, bias, scale)
    assert out2.shape == (N2, 1)
    assert jnp.allclose(out2, ref2, atol=1e-5, rtol=1e-5), "mismatch (packed tiled)"

    # 3) un-packed fallback (N % P != 0), multi-tile with clipped edge block
    N3 = 301
    z3 = jax.random.normal(k_z, (N3, D), dtype=jnp.float32)
    out3 = jax.block_until_ready(
        planar_flow_logdet(z3, weight, bias, scale, target_tile_bytes=64 * 1024))
    ref3 = planar_flow_logdet_ref(z3, weight, bias, scale)
    assert out3.shape == (N3, 1)
    assert jnp.allclose(out3, ref3, atol=1e-5, rtol=1e-5), "mismatch (un-packed)"

    # 4) bf16 input: native-dtype streaming + in-kernel upcast
    z_bf = z.astype(jnp.bfloat16)
    out4 = jax.block_until_ready(planar_flow_logdet(z_bf, weight, bias, scale))
    ref4 = planar_flow_logdet_ref(z_bf.astype(jnp.float32), weight, bias, scale)
    assert out4.shape == (N, 1)
    assert jnp.allclose(out4, ref4, atol=1e-4, rtol=1e-4), "mismatch (bf16)"

    print("KERNEL_OK")
</pallas_src>

<mosaic_0001>
module attributes {stable_mosaic.version = 11 : i64} {
  func.func @_planar_logdet_packed_kernel(%arg0: i32, %arg1: memref<2xf32, #tpu.memory_space<smem>>, %arg2: memref<8x128xf32, #tpu.memory_space<vmem>>, %arg3: memref<1x128xf32, #tpu.memory_space<vmem>>, %arg4: memref<8x4xf32, #tpu.memory_space<vmem>>) attributes {dimension_semantics = [#tpu.dimension_semantics<parallel>], iteration_bounds = array<i64: 1>, scalar_prefetch = 0 : i64, scratch_operands = 0 : i64, tpu.core_type = #tpu.core_type<tc>, window_params = [{transform_indices = @transform_0, window_bounds = array<i64: 2>}, {transform_indices = @transform_1, window_bounds = array<i64: 8, 128>}, {pipeline_mode = #tpu.pipeline_mode<synchronous>, transform_indices = @transform_2, window_bounds = array<i64: 1, 128>}, {transform_indices = @transform_3, window_bounds = array<i64: 8, 4>}]} {
    %c0 = arith.constant 0 : index
    %0 = memref.load %arg1[%c0] : memref<2xf32, #tpu.memory_space<smem>>
    %c1 = arith.constant 1 : index
    %1 = memref.load %arg1[%c1] : memref<2xf32, #tpu.memory_space<smem>>
    %c0_0 = arith.constant 0 : index
    %c0_1 = arith.constant 0 : index
    %2 = vector.load %arg2[%c0_0, %c0_1] : memref<8x128xf32, #tpu.memory_space<vmem>>, vector<8x128xf32>
    %c0_2 = arith.constant 0 : index
    %c0_3 = arith.constant 0 : index
    %3 = vector.load %arg3[%c0_2, %c0_3] : memref<1x128xf32, #tpu.memory_space<vmem>>, vector<1x128xf32>
    %4 = vector.broadcast %3 : vector<1x128xf32> to vector<8x128xf32>
    %5 = arith.mulf %2, %4 : vector<8x128xf32>
    %6 = vector.extract_strided_slice %5 {offsets = [0, 16], sizes = [8, 112], strides = [1, 1]} : vector<8x128xf32> to vector<8x112xf32>
    %7 = vector.extract_strided_slice %5 {offsets = [0, 0], sizes = [8, 16], strides = [1, 1]} : vector<8x128xf32> to vector<8x16xf32>
    %8 = tpu.concatenate %6, %7 in 1 : vector<8x112xf32>, vector<8x16xf32> -> vector<8x128xf32>
    %9 = arith.addf %5, %8 : vector<8x128xf32>
    %10 = vector.extract_strided_slice %9 {offsets = [0, 8], sizes = [8, 120], strides = [1, 1]} : vector<8x128xf32> to vector<8x120xf32>
    %11 = vector.extract_strided_slice %9 {offsets = [0, 0], sizes = [8, 8], strides = [1, 1]} : vector<8x128xf32> to vector<8x8xf32>
    %12 = tpu.concatenate %10, %11 in 1 : vector<8x120xf32>, vector<8x8xf32> -> vector<8x128xf32>
    %13 = arith.addf %9, %12 : vector<8x128xf32>
    %14 = vector.extract_strided_slice %13 {offsets = [0, 4], sizes = [8, 124], strides = [1, 1]} : vector<8x128xf32> to vector<8x124xf32>
    %15 = vector.extract_strided_slice %13 {offsets = [0, 0], sizes = [8, 4], strides = [1, 1]} : vector<8x128xf32> to vector<8x4xf32>
    %16 = tpu.concatenate %14, %15 in 1 : vector<8x124xf32>, vector<8x4xf32> -> vector<8x128xf32>
    %17 = arith.addf %13, %16 : vector<8x128xf32>
    %18 = vector.extract_strided_slice %17 {offsets = [0, 2], sizes = [8, 126], strides = [1, 1]} : vector<8x128xf32> to vector<8x126xf32>
    %19 = vector.extract_strided_slice %17 {offsets = [0, 0], sizes = [8, 2], strides = [1, 1]} : vector<8x128xf32> to vector<8x2xf32>
    %20 = tpu.concatenate %18, %19 in 1 : vector<8x126xf32>, vector<8x2xf32> -> vector<8x128xf32>
    %21 = arith.addf %17, %20 : vector<8x128xf32>
    %22 = vector.extract_strided_slice %21 {offsets = [0, 1], sizes = [8, 127], strides = [1, 1]} : vector<8x128xf32> to vector<8x127xf32>
    %23 = vector.extract_strided_slice %21 {offsets = [0, 0], sizes = [8, 1], strides = [1, 1]} : vector<8x128xf32> to vector<8x1xf32>
    %24 = tpu.concatenate %22, %23 in 1 : vector<8x127xf32>, vector<8x1xf32> -> vector<8x128xf32>
    %25 = arith.addf %21, %24 : vector<8x128xf32>
    %26 = vector.extract_strided_slice %25 {offsets = [0, 0], sizes = [8, 1], strides = [1, 1]} : vector<8x128xf32> to vector<8x1xf32>
    %27 = vector.extract_strided_slice %25 {offsets = [0, 32], sizes = [8, 1], strides = [1, 1]} : vector<8x128xf32> to vector<8x1xf32>
    %28 = vector.extract_strided_slice %25 {offsets = [0, 64], sizes = [8, 1], strides = [1, 1]} : vector<8x128xf32> to vector<8x1xf32>
    %29 = vector.extract_strided_slice %25 {offsets = [0, 96], sizes = [8, 1], strides = [1, 1]} : vector<8x128xf32> to vector<8x1xf32>
    %30 = tpu.concatenate %26, %27, %28, %29 in 1 : vector<8x1xf32>, vector<8x1xf32>, vector<8x1xf32>, vector<8x1xf32> -> vector<8x4xf32>
    %31 = vector.broadcast %0 : f32 to vector<8x4xf32>
    %32 = arith.addf %30, %31 : vector<8x4xf32>
    %33 = math.tanh %32 : vector<8x4xf32>
    %34 = arith.mulf %33, %33 : vector<8x4xf32>
    %cst = arith.constant 1.000000e+00 : f32
    %35 = vector.broadcast %cst : f32 to vector<8x4xf32>
    %36 = arith.subf %35, %34 : vector<8x4xf32>
    %37 = vector.broadcast %1 : f32 to vector<8x4xf32>
    %38 = arith.mulf %36, %37 : vector<8x4xf32>
    %cst_4 = arith.constant 1.000000e+00 : f32
    %39 = vector.broadcast %cst_4 : f32 to vector<8x4xf32>
    %40 = arith.addf %39, %38 : vector<8x4xf32>
    %41 = math.absf %40 : vector<8x4xf32>
    %cst_5 = arith.constant 1.000000e-07 : f32
    %42 = vector.broadcast %cst_5 : f32 to vector<8x4xf32>
    %43 = arith.addf %41, %42 : vector<8x4xf32>
    %44 = math.log %43 : vector<8x4xf32>
    %c0_6 = arith.constant 0 : index
    %c0_7 = arith.constant 0 : index
    %45 = vector.load %arg4[%c0_6, %c0_7] : memref<8x4xf32, #tpu.memory_space<vmem>>, vector<8x4xf32>
    tpu.vector_store %arg4[%c0_6, %c0_7], %44 {strides = array<i32>} : memref<8x4xf32, #tpu.memory_space<vmem>>, vector<8x4xf32>,
    return
  }
  func.func @transform_0(%arg0: i32) -> i32 {
    %c0_i32 = arith.constant 0 : i32
    %c0_i32_0 = arith.constant 0 : i32
    return %c0_i32 : i32
  }
  func.func @transform_1(%arg0: i32) -> (i32, i32) {
    %c0_i32 = arith.constant 0 : i32
    %c0_i32_0 = arith.constant 0 : i32
    return %arg0, %c0_i32 : i32, i32
  }
  func.func @transform_2(%arg0: i32) -> (i32, i32) {
    %c0_i32 = arith.constant 0 : i32
    %c0_i32_0 = arith.constant 0 : i32
    %c0_i32_1 = arith.constant 0 : i32
    return %c0_i32, %c0_i32_0 : i32, i32
  }
  func.func @transform_3(%arg0: i32) -> (i32, i32) {
    %c0_i32 = arith.constant 0 : i32
    %c0_i32_0 = arith.constant 0 : i32
    return %arg0, %c0_i32 : i32, i32
  }
}

</mosaic_0001>

<llo_original>
// kernel: tpu_custom_call.1
$region0: #{tpu_custom_call.1}
  #allocation0 [shape = 'u32[]', space=smem, size = 0x4, offset = 0x4, fixed_abs, tag = 'smem constant byte address 0x4 - core index']
  #allocation1 [shape = 'u32[144,128]{1,0:T(1,128)}', space=vmem, size = 0x12000, scoped, tag = 'internal scratch']
  %s0 = inlined_call_operand.hbm [shape: f32[2], index: 0, kind: input, shape index: {}]
  %s1 = inlined_call_operand.vmem [shape: f32[2,128], index: 1, kind: input, shape index: {}]
  %s2 = inlined_call_operand.vmem [shape: f32[1,128], index: 2, kind: input, shape index: {}]
  %s3 = inlined_call_operand.hbm [shape: f32[2,4], index: 3, kind: output, shape index: {}]
  %s4 = sld [smem:[#allocation0]]
  $region26: #{tpu_custom_call.1} parent=0
    _
  %s6 = ssub.s32 1, %s4
  %s7 = scalar_select 0, %s6, %s4
  $region1: #{tpu_custom_call.1} parent=0
    #allocation2 [shape = 'u8[512]{0}', space=smem, size = 0x200, scoped, tag = 'input window, operand 0, single buffered']
    #allocation3 [shape = 's32[1]{0}', space=sflag, size = 0x4, scoped, tag = 'scoped memory for tpu_custom_call.1']
    #allocation4 [shape = 's32[1]{0}', space=sflag, size = 0x4, scoped, tag = 'scoped memory for tpu_custom_call.1']
    #allocation5 [shape = 'u8[4096]{0}', space=vmem, size = 0x1000, scoped, tag = 'output window, operand 0, single buffered']
    %8 = vsyncpa [#allocation4], 0
    %9 = vsyncpa [#allocation3], 0
    // Predicated region
    $region2: #{tpu_custom_call.1} parent=1 // pred_check
      _
    $region3: #{tpu_custom_call.1} parent=1 // pred_check_branch
      %11 = sbr.rel (0) target = $region5
    $region4: #{tpu_custom_call.1} parent=1 // pred_region
      %s13 = ssub.s32 16, 16
      %14 = vsyncadd [#allocation4], %s13
      %17 = dma.hbm_to_smem %s0, 16, [#allocation2], [#allocation4]
    $region5: #{tpu_custom_call.1} parent=1 // pred_fallthru
      _
    // Predicated region
    $region6: #{tpu_custom_call.1} parent=1 // pred_check
      _
    $region7: #{tpu_custom_call.1} parent=1 // pred_check_branch
      %19 = sbr.rel (0) target = $region9
    $region8: #{tpu_custom_call.1} parent=1 // pred_region
      _
    $region9: #{tpu_custom_call.1} parent=1 // pred_fallthru
      _
    // Predicated region
    $region10: #{tpu_custom_call.1} parent=1 // pred_check
      _
    $region11: #{tpu_custom_call.1} parent=1 // pred_check_branch
      %21 = sbr.rel (0) target = $region13
    $region12: #{tpu_custom_call.1} parent=1 // pred_region
      _
    $region13: #{tpu_custom_call.1} parent=1 // pred_fallthru
      _
    // Predicated region
    $region14: #{tpu_custom_call.1} parent=1 // pred_check
      _
    $region15: #{tpu_custom_call.1} parent=1 // pred_check_branch
      %23 = sbr.rel (0) target = $region17
    $region16: #{tpu_custom_call.1} parent=1 // pred_region
      %24 = dma.done [#allocation4], 16
    $region17: #{tpu_custom_call.1} parent=1 // pred_fallthru
      _
    %25 = sfence
    %s26 = sld [smem:[#allocation2]]
    %s27 = sld [smem:[#allocation2 + $0x1]]
    %v28 = vld [vmem:[%s1] sm:$0xff]
    %v29 = vld [vmem:[%s2] sm:$0x1]
    %v31 = vlaneseq
    %v32 = vshrl.u32 %v31, 7
    %v33 = vsub.s32 0, %v32
    %v34 = vrot.slane %v29, %v33
    %v36 = vmul.f32 %v28, %v34
    %38 = vrot.lane.b32.xlu0 %v36, 112
    %v39 = vpop.permute.xlu0 %38
    %v41 = vadd.f32 %v36, %v39
    %43 = vrot.lane.b32.xlu0 %v41, 120
    %v44 = vpop.permute.xlu0 %43
    %v46 = vadd.f32 %v41, %v44
    %48 = vrot.lane.b32.xlu0 %v46, 124
    %v49 = vpop.permute.xlu0 %48
    %v51 = vadd.f32 %v46, %v49
    %53 = vrot.lane.b32.xlu0 %v51, 126
    %v54 = vpop.permute.xlu0 %53
    %v56 = vadd.f32 %v51, %v54
    %58 = vrot.lane.b32.xlu0 %v56, 127
    %v59 = vpop.permute.xlu0 %58
    %v61 = vadd.f32 %v56, %v59
    %63 = vrot.lane.b32.xlu0 %v61, 97
    %v64 = vpop.permute.xlu0 %63
    %66 = vrot.lane.b32.xlu0 %v61, 66
    %v67 = vpop.permute.xlu0 %66
    %69 = vrot.lane.b32.xlu0 %v61, 35
    %v70 = vpop.permute.xlu0 %69
    %vm72 = vcmask 7168
    %v73 = vsel %vm72, %v61, %v64
    %vm74 = vcmask 15360
    %v75 = vsel %vm74, %v73, %v67
    %vm76 = vcmask 23552
    %v77 = vsel %vm76, %v75, %v70
    %v78 = vstv %s26
    %v79 = vadd.f32 %v77, %v78
    %v80 = vtanh.pop %v79
    %v81 = vmul.f32 %v80, %v80
    %v82 = vsub.f32 1.0, %v81
    %v83 = vstv %s27
    %v84 = vmul.f32 %v82, %v83
    %v85 = vadd.f32 %v84, 1.0
    %v86 = vand.u32 2147483647, %v85
    %v87 = vadd.f32 %v86, 1e-07
    %v88 = vlog2.pop %v87
    %v89 = vmul.f32 %v88, 0.6931472
    %vm90 = vcmask 31744
    %91 = vst.msk [vmem:[#allocation5] sm:$0xff] %vm90, %v89
    // Predicated region
    $region18: #{tpu_custom_call.1} parent=1 // pred_check
      _
    $region19: #{tpu_custom_call.1} parent=1 // pred_check_branch
      %93 = sbr.rel (0) target = $region21
    $region20: #{tpu_custom_call.1} parent=1 // pred_region
      %s95 = ssub.s32 128, 32
      %96 = vsyncadd [#allocation3], %s95
      %s97 = sshll.u32 [#allocation5], 4
      %s98 = int_to_ptr.vmem [resolvable:$true] %s97
      %103 = dma.vmem_to_hbm [thread:$0]  %s98, 32, %s3, [#allocation3], 32, 32, 2
    $region21: #{tpu_custom_call.1} parent=1 // pred_fallthru
      _
    // Predicated region
    $region22: #{tpu_custom_call.1} parent=1 // pred_check
      _
    $region23: #{tpu_custom_call.1} parent=1 // pred_check_branch
      %105 = sbr.rel (0) target = $region25
    $region24: #{tpu_custom_call.1} parent=1 // pred_region
      %106 = dma.done [#allocation3], 128
    $region25: #{tpu_custom_call.1} parent=1 // pred_fallthru
      _
    %107 = vsyncpa [#allocation3], 1
    %108 = vsyncpa [#allocation4], 1

</llo_original>
